<compile_context>
chip_gen: v7x
topology: tpu7x:2x2x1
jax: 0.10.0
libtpu: 0.0.40
codegen_flags: <defaults>
</compile_context>

<pallas_src>
import jax
import jax.numpy as jnp
from jax.experimental import pallas as pl
from jax.experimental.pallas import tpu as pltpu

_TARGET_TILE_BYTES = 4 * 1024 * 1024   # ~4 MiB per tile; x4 (in+out, 2 bufs) = 16 MiB
_VMEM_LIMIT_BYTES = 32 * 1024 * 1024   # headroom over the 16 MiB footprint; fits all gens
_LANE_CHOICES = (1024, 512, 256, 128)  # widest lane-dense view that divides the input


def _round_up(x: int, m: int) -> int:
    return ((x + m - 1) // m) * m


def _sublane_multiple(dtype) -> int:
    # f32 -> 8, bf16/f16 -> 16, int8/fp8 -> 32 (sub-32-bit packing along sublanes).
    return max(8, 32 // jnp.dtype(dtype).itemsize)


def _compute_dtype(io_dtype):
    """bf16-native transcendental on v6e/v7x; f32 upcast on v5e and earlier."""
    if jnp.dtype(io_dtype) == jnp.dtype(jnp.float32):
        return jnp.float32
    try:
        kind = jax.devices()[0].device_kind.lower()
    except Exception:  # pragma: no cover - defensive; default to the safe path
        kind = ""
    if "v6" in kind or "v7" in kind:
        return io_dtype
    return jnp.float32


def _make_sigmoid_kernel(compute_dtype):
    def kernel(x_ref, o_ref):
        # One EUP tanh per element; sigmoid(x) = 0.5 * (tanh(0.5 x) + 1).
        x = x_ref[...].astype(compute_dtype)
        y = 0.5 * (jnp.tanh(0.5 * x) + 1.0)
        o_ref[...] = y.astype(o_ref.dtype)
    return kernel


@jax.jit
def tudui_forward(x: jax.Array) -> jax.Array:
    """Tudui.forward: elementwise sigmoid via a lane-dense Pallas TPU kernel."""
    orig_shape = x.shape
    total = x.size
    itemsize = jnp.dtype(x.dtype).itemsize
    sub = _sublane_multiple(x.dtype)

    # --- layout plumbing (wrapper side, no extra compute) -------------------
    # Widest lane count whose (lanes * sublane) chunk divides `total` exactly
    # -> no pad / no slice (no extra HBM passes) in the common case.
    lanes = None
    for cand in _LANE_CHOICES:
        if total % (cand * sub) == 0:
            lanes = cand
            break

    flat = x.reshape(-1)
    if lanes is None:
        lanes = 128
        pad = (-total) % (lanes * sub)
        flat = jnp.pad(flat, (0, pad))       # rare fallback only (tail < lanes*sub)
        padded_total = total + pad
    else:
        padded_total = total

    rows = padded_total // lanes
    x2d = flat.reshape(rows, lanes)

    # --- tile sizing ---------------------------------------------------------
    # ~4 MiB tiles; keep row counts multiples of the dtype's sublane packing.
    max_tile_rows = max(sub, (_TARGET_TILE_BYTES // (lanes * itemsize)) // sub * sub)
    num_tiles = pl.cdiv(rows, max_tile_rows)
    if num_tiles < 2 and rows >= 2 * sub:
        num_tiles = 2                         # keep both v7x TensorCores busy
    tile_rows = min(rows, _round_up(pl.cdiv(rows, num_tiles), sub))
    grid = (pl.cdiv(rows, tile_rows),)

    out2d = pl.pallas_call(
        _make_sigmoid_kernel(_compute_dtype(x.dtype)),
        out_shape=jax.ShapeDtypeStruct((rows, lanes), x.dtype),
        grid=grid,
        in_specs=[pl.BlockSpec((tile_rows, lanes), lambda i: (i, 0))],
        out_specs=pl.BlockSpec((tile_rows, lanes), lambda i: (i, 0)),
        compiler_params=pltpu.CompilerParams(
            dimension_semantics=("parallel",),
            vmem_limit_bytes=_VMEM_LIMIT_BYTES,
        ),
        cost_estimate=pl.CostEstimate(
            flops=3 * total,
            transcendentals=total,
            bytes_accessed=2 * total * itemsize,
        ),
    )(x2d)

    out_flat = out2d.reshape(-1)
    if padded_total != total:
        out_flat = out_flat[:total]
    return out_flat.reshape(orig_shape)


if __name__ == "__main__":
    # Tudui has no learnable parameters (ReLU is defined but unused in forward).
    key = jax.random.PRNGKey(0)
    x = jax.random.normal(key, (2, 4, 16, 16), dtype=jnp.float32)

    out = jax.block_until_ready(tudui_forward(x))

    # Correctness check against the pure-JAX reference.
    ref = jax.nn.sigmoid(x)
    assert out.shape == x.shape and out.dtype == x.dtype
    assert jnp.allclose(out, ref, atol=1e-6, rtol=1e-6)

    print("KERNEL_OK")
</pallas_src>

<mosaic_0001>
module attributes {stable_mosaic.version = 11 : i64} {
  func.func @kernel(%arg0: i32, %arg1: memref<8x256xf32, #tpu.memory_space<vmem>>, %arg2: memref<8x256xf32, #tpu.memory_space<vmem>>) attributes {dimension_semantics = [#tpu.dimension_semantics<parallel>], iteration_bounds = array<i64: 1>, scalar_prefetch = 0 : i64, scratch_operands = 0 : i64, tpu.core_type = #tpu.core_type<tc>, window_params = [{transform_indices = @transform_0, window_bounds = array<i64: 8, 256>}, {transform_indices = @transform_1, window_bounds = array<i64: 8, 256>}]} {
    %c0 = arith.constant 0 : index
    %c0_0 = arith.constant 0 : index
    %0 = vector.load %arg1[%c0, %c0_0] : memref<8x256xf32, #tpu.memory_space<vmem>>, vector<8x256xf32>
    %cst = arith.constant 5.000000e-01 : f32
    %1 = vector.broadcast %cst : f32 to vector<8x256xf32>
    %2 = arith.mulf %1, %0 : vector<8x256xf32>
    %3 = math.tanh %2 : vector<8x256xf32>
    %cst_1 = arith.constant 1.000000e+00 : f32
    %4 = vector.broadcast %cst_1 : f32 to vector<8x256xf32>
    %5 = arith.addf %3, %4 : vector<8x256xf32>
    %cst_2 = arith.constant 5.000000e-01 : f32
    %6 = vector.broadcast %cst_2 : f32 to vector<8x256xf32>
    %7 = arith.mulf %6, %5 : vector<8x256xf32>
    %c0_3 = arith.constant 0 : index
    %c0_4 = arith.constant 0 : index
    %8 = vector.load %arg2[%c0_3, %c0_4] : memref<8x256xf32, #tpu.memory_space<vmem>>, vector<8x256xf32>
    tpu.vector_store %arg2[%c0_3, %c0_4], %7 {strides = array<i32>} : memref<8x256xf32, #tpu.memory_space<vmem>>, vector<8x256xf32>,
    return
  }
  func.func @transform_0(%arg0: i32) -> (i32, i32) {
    %c0_i32 = arith.constant 0 : i32
    %c0_i32_0 = arith.constant 0 : i32
    return %arg0, %c0_i32 : i32, i32
  }
  func.func @transform_1(%arg0: i32) -> (i32, i32) {
    %c0_i32 = arith.constant 0 : i32
    %c0_i32_0 = arith.constant 0 : i32
    return %arg0, %c0_i32 : i32, i32
  }
}

</mosaic_0001>

<llo_original>
// kernel: tudui_forward.1
$region0: #{tudui_forward.1}
  #allocation0 [shape = 'u32[]', space=smem, size = 0x4, offset = 0x4, fixed_abs, tag = 'smem constant byte address 0x4 - core index']
  #allocation1 [shape = 'u32[144,128]{1,0:T(1,128)}', space=vmem, size = 0x12000, scoped, tag = 'internal scratch']
  %s0 = inlined_call_operand.vmem [shape: f32[8,256], index: 0, kind: input, shape index: {}]
  %s1 = inlined_call_operand.vmem [shape: f32[8,256], index: 1, kind: output, shape index: {}]
  %s2 = sld [smem:[#allocation0]]
  $region14: #{tudui_forward.1} parent=0
    _
  %s4 = ssub.s32 1, %s2
  %s5 = scalar_select 0, %s4, %s2
  // Predicated region
  $region2: #{tudui_forward.1} parent=0 // pred_check
    _
  $region3: #{tudui_forward.1} parent=0 // pred_check_branch
    %7 = sbr.rel (0) target = $region5
  $region4: #{tudui_forward.1} parent=0 // pred_region
    _
  $region5: #{tudui_forward.1} parent=0 // pred_fallthru
    _
  %v8 = vld [vmem:[%s0] sm:$0xff]
  %v9 = vld [vmem:[%s0 + $0x8] sm:$0xff]
  %v10 = vmul.f32 %v8, 0.5
  %v11 = vmul.f32 %v9, 0.5
  %v12 = vtanh.pop %v10
  %v13 = vtanh.pop %v11
  %v14 = vadd.f32 %v12, 1.0
  %v15 = vadd.f32 %v13, 1.0
  %v16 = vmul.f32 %v14, 0.5
  %v17 = vmul.f32 %v15, 0.5
  %18 = vst [vmem:[%s1] sm:$0xff] %v16
  %19 = vst [vmem:[%s1 + $0x8] sm:$0xff] %v17
  // Predicated region
  $region6: #{tudui_forward.1} parent=0 // pred_check
    _
  $region7: #{tudui_forward.1} parent=0 // pred_check_branch
    %21 = sbr.rel (0) target = $region9
  $region8: #{tudui_forward.1} parent=0 // pred_region
    _
  $region9: #{tudui_forward.1} parent=0 // pred_fallthru
    _
  // Predicated region
  $region10: #{tudui_forward.1} parent=0 // pred_check
    _
  $region11: #{tudui_forward.1} parent=0 // pred_check_branch
    %23 = sbr.rel (0) target = $region13
  $region12: #{tudui_forward.1} parent=0 // pred_region
    _
  $region13: #{tudui_forward.1} parent=0 // pred_fallthru
    _

</llo_original>
